<compile_context>
chip_gen: v7x
topology: tpu7x:2x2x1
jax: 0.10.0
libtpu: 0.0.40
codegen_flags: <defaults>
</compile_context>

<pallas_src>
import math

import jax
import jax.numpy as jnp
from jax.experimental import pallas as pl
from jax.experimental.pallas import tpu as pltpu


def _round_up(v, mult):
    return ((v + mult - 1) // mult) * mult


def _fold_factor(k, hidden, cap=8):
    """Smallest F such that F*k and F*hidden are multiples of 128 lanes (capped)."""
    f = 1
    for d in (k, hidden):
        need = 128 // math.gcd(d, 128)
        f = f * need // math.gcd(f, need)  # lcm(f, need)
    return int(min(f, cap))


def _select_tile_m(m_f, kf, nf, x_itemsize, w_itemsize, out_itemsize,
                   vmem_budget=24 * 1024 * 1024):
    """Largest folded-row tile (multiple of 8, capped at 8192) whose double-buffered X/Y
    tiles plus the VMEM-resident weight/bias fit the budget.  Folded blocks are
    lane-dense (last dim a multiple of 128), so these byte counts are the actual
    padded-VMEM footprints (unlike the previous 4x underestimate on 32-wide blocks)."""
    resident = 2 * kf * nf * w_itemsize + 2 * 8 * nf * 4   # weight + sublane-padded bias
    per_row = 2 * (kf * x_itemsize + nf * out_itemsize)    # double-buffered X row + Y row
    avail = max(vmem_budget - resident, 8 * per_row)
    tm = min(8192, avail // per_row)
    tm = max(8, (tm // 8) * 8)
    return int(min(tm, m_f))


def _emb_attn_kernel(x_ref, w_ref, b_ref, o_ref):
    # x_ref: (tm, Kf); w_ref: (Kf, Nf) block-diagonal weight in (K', N') layout.
    # Plain (1,0) contraction on the MXU (no RHS transpose), f32 accumulation,
    # f32 bias add, cast to the output dtype.
    acc = jnp.dot(x_ref[...], w_ref[...], preferred_element_type=jnp.float32)
    o_ref[...] = (acc + b_ref[...]).astype(o_ref.dtype)


@jax.jit
def emb_attn_forward(x, weight, bias):
    """x: (batch, ents, n, EMBED); weight: (HIDDEN, n*EMBED); bias: (HIDDEN,).

    Returns (batch, ents, HIDDEN) in x.dtype.  Pass bf16 x/weight on v6e/v7x to halve
    HBM traffic (accumulation and bias add stay f32).
    """
    batch, ents, n, embed = x.shape
    k = n * embed
    hidden = weight.shape[0]
    m = batch * ents

    fold = _fold_factor(k, hidden)          # F=4 for K=HIDDEN=32 (128-lane dense)
    kf, nf = fold * k, fold * hidden

    # Flatten, pad rows to a multiple of 8*fold (no masked tail stores), then fold
    # `fold` consecutive rows into one lane-dense row (free reshape for contiguous x).
    x2d = x.reshape(m, k)
    m_pad = _round_up(m, 8 * fold)
    if m_pad != m:
        x2d = jnp.pad(x2d, ((0, m_pad - m), (0, 0)))
    m_f = m_pad // fold
    x_f = x2d.reshape(m_f, kf)

    # Block-diagonal weight, (K', N') layout; folded bias kept in f32.
    w_kn = weight.T                                            # (K, HIDDEN)
    w_bd = jnp.kron(jnp.eye(fold, dtype=w_kn.dtype), w_kn)     # (Kf, Nf)
    b_f = jnp.tile(bias.astype(jnp.float32), fold).reshape(1, nf)

    tm = _select_tile_m(m_f, kf, nf,
                        x.dtype.itemsize, weight.dtype.itemsize, x.dtype.itemsize)
    if m_f >= 512:
        # Guarantee >= 2 grid steps so the "parallel" axis can be split across both
        # v7x TensorCores (harmless on single-TC v5e/v6e).
        tm = min(tm, _round_up(-(-m_f // 2), 8))
    grid = (pl.cdiv(m_f, tm),)

    cost = pl.CostEstimate(
        flops=int(2 * m * k * hidden),
        transcendentals=0,
        bytes_accessed=int(m * k * x.dtype.itemsize
                           + kf * nf * weight.dtype.itemsize
                           + nf * 4
                           + m * hidden * x.dtype.itemsize),
    )

    out_f = pl.pallas_call(
        _emb_attn_kernel,
        out_shape=jax.ShapeDtypeStruct((m_f, nf), x.dtype),
        grid=grid,
        in_specs=[
            pl.BlockSpec((tm, kf), lambda i: (i, 0)),   # X tile, pipelined over folded M
            pl.BlockSpec((kf, nf), lambda i: (0, 0)),   # block-diag weight: VMEM-resident
            pl.BlockSpec((1, nf), lambda i: (0, 0)),    # folded bias:      VMEM-resident
        ],
        out_specs=pl.BlockSpec((tm, nf), lambda i: (i, 0)),
        compiler_params=pltpu.CompilerParams(
            dimension_semantics=("parallel",),           # megacore sharding on v7x
            vmem_limit_bytes=32 * 1024 * 1024,
        ),
        cost_estimate=cost,
    )(x_f, w_bd, b_f)

    out2d = out_f.reshape(m_pad, hidden)
    if m_pad != m:
        out2d = out2d[:m]
    return out2d.reshape(batch, ents, hidden)


def _reference(x, weight, bias):
    batch, ents, n, embed = x.shape
    x2d = x.reshape(batch, ents, n * embed).astype(jnp.float32)
    return (jnp.einsum("bek,nk->ben", x2d, weight.astype(jnp.float32))
            + bias.astype(jnp.float32))


if __name__ == "__main__":
    # Small shapes consistent with the module's forward:
    #   batch=2, ents=8, n=4, EMBED=8 -> in_features=32, HIDDEN=32
    batch, ents, n, EMBED, HIDDEN = 2, 8, 4, 8, 32
    in_features = n * EMBED

    key = jax.random.PRNGKey(0)
    kx, kw, kb = jax.random.split(key, 3)

    x = jax.random.normal(kx, (batch, ents, n, EMBED), dtype=jnp.float32)

    # Deterministic parameter init mimicking nn.Linear default (uniform +/- 1/sqrt(fan_in)).
    bound = 1.0 / jnp.sqrt(jnp.float32(in_features))
    weight = jax.random.uniform(kw, (HIDDEN, in_features), dtype=jnp.float32,
                                minval=-bound, maxval=bound)
    bias = jax.random.uniform(kb, (HIDDEN,), dtype=jnp.float32,
                              minval=-bound, maxval=bound)

    # f32 path: exact vs reference (includes M padding 16 -> 32 and the row fold).
    out = jax.block_until_ready(emb_attn_forward(x, weight, bias))
    ref = _reference(x, weight, bias)
    assert out.shape == (batch, ents, HIDDEN)
    assert jnp.allclose(out, ref, atol=2e-5, rtol=2e-5), "mismatch vs reference (small)"

    # Larger batch*ents exercises the folded, multi-step "parallel" grid path
    # (M = 2048 -> 512 folded rows -> 2 row tiles; block-diag weight resident across steps).
    xb = jax.random.normal(kx, (8, 256, n, EMBED), dtype=jnp.float32)
    outb = jax.block_until_ready(emb_attn_forward(xb, weight, bias))
    refb = _reference(xb, weight, bias)
    assert outb.shape == (8, 256, HIDDEN)
    assert jnp.allclose(outb, refb, atol=2e-5, rtol=2e-5), "mismatch vs reference (tiled)"

    # bf16 input path (halves HBM traffic on v6e/v7x; accumulation/bias stay f32).
    out_bf = jax.block_until_ready(
        emb_attn_forward(xb.astype(jnp.bfloat16), weight.astype(jnp.bfloat16), bias))
    assert out_bf.dtype == jnp.bfloat16
    assert jnp.allclose(out_bf.astype(jnp.float32), refb, atol=5e-2, rtol=5e-2), \
        "mismatch vs reference (bf16)"

    print("KERNEL_OK")
</pallas_src>

<mosaic_0001>
module attributes {stable_mosaic.version = 11 : i64} {
  func.func @_emb_attn_kernel(%arg0: i32, %arg1: memref<8x128xf32, #tpu.memory_space<vmem>>, %arg2: memref<128x128xf32, #tpu.memory_space<vmem>>, %arg3: memref<1x128xf32, #tpu.memory_space<vmem>>, %arg4: memref<8x128xf32, #tpu.memory_space<vmem>>) attributes {dimension_semantics = [#tpu.dimension_semantics<parallel>], iteration_bounds = array<i64: 1>, scalar_prefetch = 0 : i64, scratch_operands = 0 : i64, tpu.core_type = #tpu.core_type<tc>, window_params = [{transform_indices = @transform_0, window_bounds = array<i64: 8, 128>}, {pipeline_mode = #tpu.pipeline_mode<synchronous>, transform_indices = @transform_1, window_bounds = array<i64: 128, 128>}, {pipeline_mode = #tpu.pipeline_mode<synchronous>, transform_indices = @transform_2, window_bounds = array<i64: 1, 128>}, {transform_indices = @transform_3, window_bounds = array<i64: 8, 128>}]} {
    %c0 = arith.constant 0 : index
    %c0_0 = arith.constant 0 : index
    %0 = vector.load %arg1[%c0, %c0_0] : memref<8x128xf32, #tpu.memory_space<vmem>>, vector<8x128xf32>
    %c0_1 = arith.constant 0 : index
    %c0_2 = arith.constant 0 : index
    %1 = vector.load %arg2[%c0_1, %c0_2] : memref<128x128xf32, #tpu.memory_space<vmem>>, vector<128x128xf32>
    %cst = arith.constant dense<0.000000e+00> : vector<8x128xf32>
    %2 = tpu.matmul %0, %1, %cst {dimension_numbers = #tpu.dot_dimension_numbers<[1], [0], [0], [1], [0, 0, 1, 1], [], []>} : vector<8x128xf32>, vector<128x128xf32>, vector<8x128xf32> -> vector<8x128xf32>
    %c0_3 = arith.constant 0 : index
    %c0_4 = arith.constant 0 : index
    %3 = vector.load %arg3[%c0_3, %c0_4] : memref<1x128xf32, #tpu.memory_space<vmem>>, vector<1x128xf32>
    %4 = vector.broadcast %3 : vector<1x128xf32> to vector<8x128xf32>
    %5 = arith.addf %2, %4 : vector<8x128xf32>
    %c0_5 = arith.constant 0 : index
    %c0_6 = arith.constant 0 : index
    %6 = vector.load %arg4[%c0_5, %c0_6] : memref<8x128xf32, #tpu.memory_space<vmem>>, vector<8x128xf32>
    tpu.vector_store %arg4[%c0_5, %c0_6], %5 {strides = array<i32>} : memref<8x128xf32, #tpu.memory_space<vmem>>, vector<8x128xf32>,
    return
  }
  func.func @transform_0(%arg0: i32) -> (i32, i32) {
    %c0_i32 = arith.constant 0 : i32
    %c0_i32_0 = arith.constant 0 : i32
    return %arg0, %c0_i32 : i32, i32
  }
  func.func @transform_1(%arg0: i32) -> (i32, i32) {
    %c0_i32 = arith.constant 0 : i32
    %c0_i32_0 = arith.constant 0 : i32
    %c0_i32_1 = arith.constant 0 : i32
    return %c0_i32, %c0_i32_0 : i32, i32
  }
  func.func @transform_2(%arg0: i32) -> (i32, i32) {
    %c0_i32 = arith.constant 0 : i32
    %c0_i32_0 = arith.constant 0 : i32
    %c0_i32_1 = arith.constant 0 : i32
    return %c0_i32, %c0_i32_0 : i32, i32
  }
  func.func @transform_3(%arg0: i32) -> (i32, i32) {
    %c0_i32 = arith.constant 0 : i32
    %c0_i32_0 = arith.constant 0 : i32
    return %arg0, %c0_i32 : i32, i32
  }
}

</mosaic_0001>

<llo_original>
// kernel: tile.8
$region0: #{tile.8}
  #allocation0 [shape = 's32[1]{0}', space=sflag, size = 0x4, scoped, tag = 'scoped memory for tile.8']
  %s0 = inlined_call_operand.vmem [shape: f32[32], index: 0, kind: input, shape index: {}]
  %s1 = inlined_call_operand.vmem [shape: f32[4,32], index: 1, kind: output, shape index: {}]
  // Predicated region
  $region2: #{tile.8} parent=0 // pred_check
    _
  $region3: #{tile.8} parent=0 // pred_check_branch
    %3 = sbr.rel (0) target = $region5
  $region4: #{tile.8} parent=0 // pred_region
    _
  $region5: #{tile.8} parent=0 // pred_fallthru
    _
  %v4 = vld [vmem:[%s0] ss:$0 sm:$0xff]
  %5 = vst [vmem:[%s1] sm:$0xf] %v4

// kernel: tile.9
$region0: #{tile.9}
  %s0 = inlined_call_operand.vmem [shape: f32[4,32], index: 0, kind: input, shape index: {}]
  %s1 = inlined_call_operand.vmem [shape: f32[1,128], index: 1, kind: output, shape index: {}]
  $region1: #{tile.9} parent=0
    #allocation0 [shape = 'u8[4096]{0}', space=vmem, size = 0x1000, scoped, tag = 'scoped mem for output reshape']
    #allocation1 [shape = 'u8[4096]{0}', space=vmem, size = 0x1000, scoped, tag = 'scoped mem for input reshape']
    %s3 = sshllo.u32 0, 4
    %v4 = vld [vmem:[%s0] sm:%s3]
    %5 = vst [vmem:[#allocation1] sm:%s3] %v4
    %v6 = vld [vmem:[#allocation1] sm:$0x1]
    %vm7 = vcmask 261120
    %8 = vst.msk [vmem:[#allocation0] sm:$0x1] %vm7, %v6
    %s9 = scalar_lea.vmem [#allocation1], 3
    %v10 = vld [vmem:[%s9] sm:$0x1]
    %11 = vrot.lane.b32.xlu0 %v10, 96
    %v12 = vpop.permute.xlu0 %11
    %vm13 = vcmask 1048320
    %14 = vst.msk [vmem:[#allocation0] sm:$0x1] %vm13, %v12
    %s15 = scalar_lea.vmem [#allocation1], 2
    %v16 = vld [vmem:[%s15] sm:$0x1]
    %17 = vrot.lane.b32.xlu0 %v16, 64
    %v18 = vpop.permute.xlu0 %17
    %vm19 = vcmask 785920
    %20 = vst.msk [vmem:[#allocation0] sm:$0x1] %vm19, %v18
    %s21 = scalar_lea.vmem [#allocation1], 1
    %v22 = vld [vmem:[%s21] sm:$0x1]
    %23 = vrot.lane.b32.xlu0 %v22, 32
    %v24 = vpop.permute.xlu0 %23
    %vm25 = vcmask 523520
    %26 = vst.msk [vmem:[#allocation0] sm:$0x1] %vm25, %v24
    %s28 = sshllo.u32 0, 1
    %v30 = vld [vmem:[#allocation0] sm:%s28]
    %s31 = sshllo.u32 0, 1
    %32 = vst [vmem:[%s1] sm:%s31] %v30

// kernel: emb_attn_forward.1
$region0: #{emb_attn_forward.1}
  #allocation0 [shape = 'u32[]', space=smem, size = 0x4, offset = 0x4, fixed_abs, tag = 'smem constant byte address 0x4 - core index']
  #allocation1 [shape = 'u32[144,128]{1,0:T(1,128)}', space=vmem, size = 0x12000, scoped, tag = 'internal scratch']
  %s0 = inlined_call_operand.vmem [shape: f32[8,128], index: 0, kind: input, shape index: {}]
  %s1 = inlined_call_operand.vmem [shape: f32[128,128], index: 1, kind: input, shape index: {}]
  %s2 = inlined_call_operand.vmem [shape: f32[1,128], index: 2, kind: input, shape index: {}]
  %s3 = inlined_call_operand.vmem [shape: f32[8,128], index: 3, kind: output, shape index: {}]
  %s4 = sld [smem:[#allocation0]]
  $region22: #{emb_attn_forward.1} parent=0
    _
  %s6 = ssub.s32 1, %s4
  %s7 = scalar_select 0, %s6, %s4
  // Predicated region
  $region2: #{emb_attn_forward.1} parent=0 // pred_check
    _
  $region3: #{emb_attn_forward.1} parent=0 // pred_check_branch
    %9 = sbr.rel (0) target = $region5
  $region4: #{emb_attn_forward.1} parent=0 // pred_region
    _
  $region5: #{emb_attn_forward.1} parent=0 // pred_fallthru
    _
  // Predicated region
  $region6: #{emb_attn_forward.1} parent=0 // pred_check
    _
  $region7: #{emb_attn_forward.1} parent=0 // pred_check_branch
    %11 = sbr.rel (0) target = $region9
  $region8: #{emb_attn_forward.1} parent=0 // pred_region
    _
  $region9: #{emb_attn_forward.1} parent=0 // pred_fallthru
    _
  // Predicated region
  $region10: #{emb_attn_forward.1} parent=0 // pred_check
    _
  $region11: #{emb_attn_forward.1} parent=0 // pred_check_branch
    %13 = sbr.rel (0) target = $region13
  $region12: #{emb_attn_forward.1} parent=0 // pred_region
    _
  $region13: #{emb_attn_forward.1} parent=0 // pred_fallthru
    _
  %v14 = vld [vmem:[%s0] sm:$0xff]
  %v15 = vld [vmem:[%s1] sm:$0xff]
  %v16 = vld [vmem:[%s1 + $0x8] sm:$0xff]
  %v17 = vld [vmem:[%s1 + $0x10] sm:$0xff]
  %v18 = vld [vmem:[%s1 + $0x18] sm:$0xff]
  %v19 = vld [vmem:[%s1 + $0x20] sm:$0xff]
  %v20 = vld [vmem:[%s1 + $0x28] sm:$0xff]
  %v21 = vld [vmem:[%s1 + $0x30] sm:$0xff]
  %v22 = vld [vmem:[%s1 + $0x38] sm:$0xff]
  %v23 = vld [vmem:[%s1 + $0x40] sm:$0xff]
  %v24 = vld [vmem:[%s1 + $0x48] sm:$0xff]
  %v25 = vld [vmem:[%s1 + $0x50] sm:$0xff]
  %v26 = vld [vmem:[%s1 + $0x58] sm:$0xff]
  %v27 = vld [vmem:[%s1 + $0x60] sm:$0xff]
  %v28 = vld [vmem:[%s1 + $0x68] sm:$0xff]
  %v29 = vld [vmem:[%s1 + $0x70] sm:$0xff]
  %v30 = vld [vmem:[%s1 + $0x78] sm:$0xff]
  %v31 = vld [vmem:[%s2] sm:$0x1]
  %v33 = vlaneseq
  %v34 = vshrl.u32 %v33, 7
  %v35 = vsub.s32 0, %v34
  %v36 = vrot.slane %v31, %v35
  %38 = vmatprep.subr.mxu0 0.0
  %39 = vmatpush1.msra.mxu0 %v15
  %40 = vmatprep.subr.mxu0 0.0
  %41 = vmatpush1.msra.mxu0 %v16
  %42 = vmatprep.subr.mxu0 0.0
  %43 = vmatpush1.msra.mxu0 %v17
  %44 = vmatprep.subr.mxu0 0.0
  %45 = vmatpush1.msra.mxu0 %v18
  %46 = vmatprep.subr.mxu0 0.0
  %47 = vmatpush1.msra.mxu0 %v19
  %48 = vmatprep.subr.mxu0 0.0
  %49 = vmatpush1.msra.mxu0 %v20
  %50 = vmatprep.subr.mxu0 0.0
  %51 = vmatpush1.msra.mxu0 %v21
  %52 = vmatprep.subr.mxu0 0.0
  %53 = vmatpush1.msra.mxu0 %v22
  %54 = vmatprep.subr.mxu0 0.0
  %55 = vmatpush1.msra.mxu0 %v23
  %56 = vmatprep.subr.mxu0 0.0
  %57 = vmatpush1.msra.mxu0 %v24
  %58 = vmatprep.subr.mxu0 0.0
  %59 = vmatpush1.msra.mxu0 %v25
  %60 = vmatprep.subr.mxu0 0.0
  %61 = vmatpush1.msra.mxu0 %v26
  %62 = vmatprep.subr.mxu0 0.0
  %63 = vmatpush1.msra.mxu0 %v27
  %64 = vmatprep.subr.mxu0 0.0
  %65 = vmatpush1.msra.mxu0 %v28
  %66 = vmatprep.subr.mxu0 0.0
  %67 = vmatpush1.msra.mxu0 %v29
  %68 = vmatprep.subr.mxu0 0.0
  %69 = vmatpush1.msra.mxu0 %v30
  %70 = vmatprep.subr.mxu0 0.0
  %71 = vmatpush1.msra.mxu0 0.0
  %72 = vmatprep.subr.mxu0 0.0
  %73 = vmatpush1.msra.mxu0 0.0
  %74 = vmatprep.subr.mxu0 0.0
  %75 = vmatpush1.msra.mxu0 0.0
  %76 = vmatprep.subr.mxu0 0.0
  %77 = vmatpush1.msra.mxu0 0.0
  %78 = vmatprep.subr.mxu0 0.0
  %79 = vmatpush1.msra.mxu0 0.0
  %80 = vmatprep.subr.mxu0 0.0
  %81 = vmatpush1.msra.mxu0 0.0
  %82 = vmatprep.subr.mxu0 0.0
  %83 = vmatpush1.msra.mxu0 0.0
  %84 = vmatprep.subr.mxu0 0.0
  %85 = vmatpush1.msra.mxu0 0.0
  %86 = vmatprep.subr.mxu0 0.0
  %87 = vmatpush1.msra.mxu0 0.0
  %88 = vmatprep.subr.mxu0 0.0
  %89 = vmatpush1.msra.mxu0 0.0
  %90 = vmatprep.subr.mxu0 0.0
  %91 = vmatpush1.msra.mxu0 0.0
  %92 = vmatprep.subr.mxu0 0.0
  %93 = vmatpush1.msra.mxu0 0.0
  %94 = vmatprep.subr.mxu0 0.0
  %95 = vmatpush1.msra.mxu0 0.0
  %96 = vmatprep.subr.mxu0 0.0
  %97 = vmatpush1.msra.mxu0 0.0
  %98 = vmatprep.subr.mxu0 0.0
  %99 = vmatpush1.msra.mxu0 0.0
  %100 = vmatprep.subr.mxu0 0.0
  %101 = vmatpush1.msra.mxu0 0.0
  %102 = vmatprep.mubr.f32.mxu0 0.0
  %103 = vmatmul.mubr.f32.gmra.mrb[0].mxu0 %v14
  %v104 = vpop.f32.mrb[0].mxu0
  %v105 = vadd.f32 %v36, %v104
  %v106 = vpop.f32.mrb[0].mxu0
  %107 = vdwg.mxu0
  %108 = vst [vmem:[%s3] sm:$0xff] %v105
  // Predicated region
  $region14: #{emb_attn_forward.1} parent=0 // pred_check
    _
  $region15: #{emb_attn_forward.1} parent=0 // pred_check_branch
    %110 = sbr.rel (0) target = $region17
  $region16: #{emb_attn_forward.1} parent=0 // pred_region
    _
  $region17: #{emb_attn_forward.1} parent=0 // pred_fallthru
    _
  // Predicated region
  $region18: #{emb_attn_forward.1} parent=0 // pred_check
    _
  $region19: #{emb_attn_forward.1} parent=0 // pred_check_branch
    %112 = sbr.rel (0) target = $region21
  $region20: #{emb_attn_forward.1} parent=0 // pred_region
    _
  $region21: #{emb_attn_forward.1} parent=0 // pred_fallthru
    _

</llo_original>
